<compile_context>
chip_gen: v6e
topology: v6e:2x2x1
jax: 0.10.0
libtpu: 0.0.40
codegen_flags: <defaults>
</compile_context>

<pallas_src>
import functools

import jax
import jax.numpy as jnp
from jax.experimental import pallas as pl
from jax.experimental.pallas import tpu as pltpu

_LANES = 128
_VMEM_LIMIT = 32 * 1024 * 1024


# ---------------------------------------------------------------------------
# Fast path: uint8, C == 4  (all 4 channels of a pixel packed in one uint32)
# ---------------------------------------------------------------------------

@functools.lru_cache(maxsize=None)
def _bitcast_is_lsb_first():
    """True if lax.bitcast_convert_type puts index 0 of the trailing uint8 axis
    into the least-significant byte of the uint32 word (one tiny device probe)."""
    probe = jax.lax.bitcast_convert_type(
        jnp.array([1, 0, 0, 0], dtype=jnp.uint8), jnp.uint32)
    return int(probe) == 1


def _make_packed_kernel(num_ch, scale, shifts):
    def kernel(x_ref, o_ref):
        # x_ref: (r_blk, 128) uint32 -- each word holds the 4 uint8 channels of a pixel
        # o_ref: (num_ch, r_blk, 128) float32 -- CHW channel planes, lane-dense
        w = x_ref[...]
        for c in range(num_ch):                       # statically unrolled (num_ch == 4)
            byte = (w >> shifts[c]) & jnp.uint32(0xFF)
            o_ref[c] = byte.astype(jnp.int32).astype(jnp.float32) * scale
    return kernel


def _choose_row_block(rows, cap=2048):
    """Largest divisor of `rows` that is a multiple of 8 and <= cap (else rows)."""
    if rows <= cap:
        return rows
    best = rows
    for r in range(8, cap + 1, 8):
        if rows % r == 0:
            best = r
    return best


def _to_tensor_packed(img, scale):
    H, W, C = img.shape
    HW = H * W
    rows = HW // _LANES

    # (H, W, 4) u8 -> (HW, 4) u8 -> (HW,) u32 -> (rows, 128) u32 lane-dense view.
    x_u32 = jax.lax.bitcast_convert_type(
        img.reshape(HW, C), jnp.uint32).reshape(rows, _LANES)

    shifts = (0, 8, 16, 24) if _bitcast_is_lsb_first() else (24, 16, 8, 0)

    r_blk = _choose_row_block(rows)
    grid = (rows // r_blk,)

    out = pl.pallas_call(
        _make_packed_kernel(C, scale, shifts),
        out_shape=jax.ShapeDtypeStruct((C, rows, _LANES), jnp.float32),
        grid_spec=pltpu.PrefetchScalarGridSpec(
            num_scalar_prefetch=0,
            grid=grid,
            in_specs=[pl.BlockSpec((r_blk, _LANES), lambda i: (i, 0))],
            out_specs=pl.BlockSpec((C, r_blk, _LANES), lambda i: (0, i, 0)),
        ),
        compiler_params=pltpu.CompilerParams(
            dimension_semantics=("parallel",),
            vmem_limit_bytes=_VMEM_LIMIT,
        ),
    )(x_u32)

    # Contiguous re-view: (C, rows*128) == (C, H*W) == (C, H, W).
    return out.reshape(C, H, W)


# ---------------------------------------------------------------------------
# Generic path: any channel count / float inputs (in-kernel transpose)
# ---------------------------------------------------------------------------

def _make_transpose_kernel(scale):
    def kernel(x_ref, o_ref):
        # x_ref: (p_blk, C) -- spatial rows on sublanes, channels on lanes
        # o_ref: (C, p_blk) float32 -- channels on sublanes, spatial lane-dense
        xf = x_ref[...].astype(jnp.float32)
        o_ref[...] = jnp.transpose(xf, (1, 0)) * scale
    return kernel


def _choose_pix_block(n_pix, cap=32768):
    if n_pix <= cap:
        return n_pix
    best = n_pix
    for r in range(256, cap + 1, 256):   # 256 covers uint8 sublane + f32 lane tiling
        if n_pix % r == 0:
            best = r
    return best


def _to_tensor_generic(img, scale):
    H, W, C = img.shape
    HW = H * W
    x2 = img.reshape(HW, C)

    p_blk = _choose_pix_block(HW)
    grid = (HW // p_blk,)

    out = pl.pallas_call(
        _make_transpose_kernel(scale),
        out_shape=jax.ShapeDtypeStruct((C, HW), jnp.float32),
        grid_spec=pltpu.PrefetchScalarGridSpec(
            num_scalar_prefetch=0,
            grid=grid,
            in_specs=[pl.BlockSpec((p_blk, C), lambda i: (i, 0))],
            out_specs=pl.BlockSpec((C, p_blk), lambda i: (0, i)),
        ),
        compiler_params=pltpu.CompilerParams(
            dimension_semantics=("parallel",),
            vmem_limit_bytes=_VMEM_LIMIT,
        ),
    )(x2)

    return out.reshape(C, H, W)


# ---------------------------------------------------------------------------
# Public wrapper (ToTensor_.forward equivalent)
# ---------------------------------------------------------------------------

def to_tensor_pallas(img):
    """Pallas TPU equivalent of transforms.functional.to_tensor for a device
    ndarray image: HWC (or HW) -> CHW float32, scaled by 1/255 for uint8."""
    if img.ndim == 2:                       # grayscale HW -> HW1
        img = img[:, :, None]
    H, W, C = img.shape
    is_u8 = img.dtype == jnp.dtype(jnp.uint8)
    scale = (1.0 / 255.0) if is_u8 else 1.0

    if is_u8 and C == 4 and (H * W) % _LANES == 0:
        return _to_tensor_packed(img, scale)
    return _to_tensor_generic(img, scale)


if __name__ == "__main__":
    # Small RGBA-style image consistent with the module's forward (HWC uint8).
    H, W, C = 16, 16, 4
    key = jax.random.PRNGKey(0)
    img = jax.random.randint(key, (H, W, C), 0, 256, dtype=jnp.int32).astype(jnp.uint8)

    out = to_tensor_pallas(img)
    out = jax.block_until_ready(out)

    # Reference: same semantics as torchvision to_tensor on a uint8 HWC ndarray.
    ref = jnp.transpose(img, (2, 0, 1)).astype(jnp.float32) / 255.0

    assert out.shape == (C, H, W)
    assert out.dtype == jnp.float32
    assert bool(jnp.allclose(out, ref, atol=1e-6, rtol=0.0))
    print("KERNEL_OK")
</pallas_src>

<mosaic_0001>
module attributes {stable_mosaic.version = 11 : i64} {
  func.func @kernel(%arg0: i32, %arg1: memref<2x128xi32, #tpu.memory_space<vmem>>, %arg2: memref<4x2x128xf32, #tpu.memory_space<vmem>>) attributes {dimension_semantics = [#tpu.dimension_semantics<parallel>], iteration_bounds = array<i64: 1>, scalar_prefetch = 0 : i64, scratch_operands = 0 : i64, tpu.core_type = #tpu.core_type<tc>, window_params = [{transform_indices = @transform_0, window_bounds = array<i64: 2, 128>}, {transform_indices = @transform_1, window_bounds = array<i64: 4, 2, 128>}]} {
    %c0 = arith.constant 0 : index
    %c0_0 = arith.constant 0 : index
    %0 = vector.load %arg1[%c0, %c0_0] : memref<2x128xi32, #tpu.memory_space<vmem>>, vector<2x128xi32>
    %c0_i32 = arith.constant 0 : i32
    %1 = vector.broadcast %c0_i32 : i32 to vector<2x128xi32>
    %2 = arith.shrui %0, %1 : vector<2x128xi32>
    %c255_i32 = arith.constant 255 : i32
    %3 = vector.broadcast %c255_i32 : i32 to vector<2x128xi32>
    %4 = arith.andi %2, %3 : vector<2x128xi32>
    %5 = arith.sitofp %4 : vector<2x128xi32> to vector<2x128xf32>
    %cst = arith.constant 0.00392156886 : f32
    %6 = vector.broadcast %cst : f32 to vector<2x128xf32>
    %7 = arith.mulf %5, %6 : vector<2x128xf32>
    %c0_1 = arith.constant 0 : index
    %c0_2 = arith.constant 0 : index
    %c0_3 = arith.constant 0 : index
    %8 = vector.load %arg2[%c0_1, %c0_2, %c0_3] : memref<4x2x128xf32, #tpu.memory_space<vmem>>, vector<1x2x128xf32>
    %9 = vector.shape_cast %8 : vector<1x2x128xf32> to vector<2x128xf32>
    %10 = vector.shape_cast %7 : vector<2x128xf32> to vector<1x2x128xf32>
    tpu.vector_store %arg2[%c0_1, %c0_2, %c0_3], %10 {strides = array<i32>} : memref<4x2x128xf32, #tpu.memory_space<vmem>>, vector<1x2x128xf32>,
    %c8_i32 = arith.constant 8 : i32
    %11 = vector.broadcast %c8_i32 : i32 to vector<2x128xi32>
    %12 = arith.shrui %0, %11 : vector<2x128xi32>
    %c255_i32_4 = arith.constant 255 : i32
    %13 = vector.broadcast %c255_i32_4 : i32 to vector<2x128xi32>
    %14 = arith.andi %12, %13 : vector<2x128xi32>
    %15 = arith.sitofp %14 : vector<2x128xi32> to vector<2x128xf32>
    %cst_5 = arith.constant 0.00392156886 : f32
    %16 = vector.broadcast %cst_5 : f32 to vector<2x128xf32>
    %17 = arith.mulf %15, %16 : vector<2x128xf32>
    %c1 = arith.constant 1 : index
    %c0_6 = arith.constant 0 : index
    %c0_7 = arith.constant 0 : index
    %18 = vector.load %arg2[%c1, %c0_6, %c0_7] : memref<4x2x128xf32, #tpu.memory_space<vmem>>, vector<1x2x128xf32>
    %19 = vector.shape_cast %18 : vector<1x2x128xf32> to vector<2x128xf32>
    %20 = vector.shape_cast %17 : vector<2x128xf32> to vector<1x2x128xf32>
    tpu.vector_store %arg2[%c1, %c0_6, %c0_7], %20 {strides = array<i32>} : memref<4x2x128xf32, #tpu.memory_space<vmem>>, vector<1x2x128xf32>,
    %c16_i32 = arith.constant 16 : i32
    %21 = vector.broadcast %c16_i32 : i32 to vector<2x128xi32>
    %22 = arith.shrui %0, %21 : vector<2x128xi32>
    %c255_i32_8 = arith.constant 255 : i32
    %23 = vector.broadcast %c255_i32_8 : i32 to vector<2x128xi32>
    %24 = arith.andi %22, %23 : vector<2x128xi32>
    %25 = arith.sitofp %24 : vector<2x128xi32> to vector<2x128xf32>
    %cst_9 = arith.constant 0.00392156886 : f32
    %26 = vector.broadcast %cst_9 : f32 to vector<2x128xf32>
    %27 = arith.mulf %25, %26 : vector<2x128xf32>
    %c2 = arith.constant 2 : index
    %c0_10 = arith.constant 0 : index
    %c0_11 = arith.constant 0 : index
    %28 = vector.load %arg2[%c2, %c0_10, %c0_11] : memref<4x2x128xf32, #tpu.memory_space<vmem>>, vector<1x2x128xf32>
    %29 = vector.shape_cast %28 : vector<1x2x128xf32> to vector<2x128xf32>
    %30 = vector.shape_cast %27 : vector<2x128xf32> to vector<1x2x128xf32>
    tpu.vector_store %arg2[%c2, %c0_10, %c0_11], %30 {strides = array<i32>} : memref<4x2x128xf32, #tpu.memory_space<vmem>>, vector<1x2x128xf32>,
    %c24_i32 = arith.constant 24 : i32
    %31 = vector.broadcast %c24_i32 : i32 to vector<2x128xi32>
    %32 = arith.shrui %0, %31 : vector<2x128xi32>
    %c255_i32_12 = arith.constant 255 : i32
    %33 = vector.broadcast %c255_i32_12 : i32 to vector<2x128xi32>
    %34 = arith.andi %32, %33 : vector<2x128xi32>
    %35 = arith.sitofp %34 : vector<2x128xi32> to vector<2x128xf32>
    %cst_13 = arith.constant 0.00392156886 : f32
    %36 = vector.broadcast %cst_13 : f32 to vector<2x128xf32>
    %37 = arith.mulf %35, %36 : vector<2x128xf32>
    %c3 = arith.constant 3 : index
    %c0_14 = arith.constant 0 : index
    %c0_15 = arith.constant 0 : index
    %38 = vector.load %arg2[%c3, %c0_14, %c0_15] : memref<4x2x128xf32, #tpu.memory_space<vmem>>, vector<1x2x128xf32>
    %39 = vector.shape_cast %38 : vector<1x2x128xf32> to vector<2x128xf32>
    %40 = vector.shape_cast %37 : vector<2x128xf32> to vector<1x2x128xf32>
    tpu.vector_store %arg2[%c3, %c0_14, %c0_15], %40 {strides = array<i32>} : memref<4x2x128xf32, #tpu.memory_space<vmem>>, vector<1x2x128xf32>,
    return
  }
  func.func @transform_0(%arg0: i32) -> (i32, i32) {
    %c0_i32 = arith.constant 0 : i32
    %c0_i32_0 = arith.constant 0 : i32
    return %arg0, %c0_i32 : i32, i32
  }
  func.func @transform_1(%arg0: i32) -> (i32, i32, i32) {
    %c0_i32 = arith.constant 0 : i32
    %c0_i32_0 = arith.constant 0 : i32
    %c0_i32_1 = arith.constant 0 : i32
    return %c0_i32, %arg0, %c0_i32_0 : i32, i32, i32
  }
}

</mosaic_0001>

<llo_original>
// kernel: tpu_custom_call.1
$region0: #{tpu_custom_call.1}
  #allocation0 [shape = 'u32[]', space=smem, size = 0x4, offset = 0x4, fixed_abs, tag = 'smem constant byte address 0x4 - core index']
  #allocation1 [shape = 'u32[144,128]{1,0:T(1,128)}', space=vmem, size = 0x12000, scoped, tag = 'internal scratch']
  %s0 = inlined_call_operand.hbm [shape: u32[2,128], index: 0, kind: input, shape index: {}]
  %s1 = inlined_call_operand.hbm [shape: f32[4,2,128], index: 1, kind: output, shape index: {}]
  %s2 = sld [smem:[#allocation0]]
  $region18: #{tpu_custom_call.1} parent=0
    _
  %s4 = ssub.s32 1, %s2
  %s5 = scalar_select 0, %s4, %s2
  $region1: #{tpu_custom_call.1} parent=0
    #allocation2 [shape = 'u8[1024]{0}', space=vmem, size = 0x400, scoped, tag = 'input window, operand 0, single buffered']
    #allocation3 [shape = 's32[1]{0}', space=sflag, size = 0x4, scoped, tag = 'scoped memory for tpu_custom_call.1']
    #allocation4 [shape = 's32[1]{0}', space=sflag, size = 0x4, scoped, tag = 'scoped memory for tpu_custom_call.1']
    #allocation5 [shape = 'u8[4096]{0}', space=vmem, size = 0x1000, scoped, tag = 'output window, operand 0, single buffered']
    %6 = vsyncpa [#allocation3], 0
    %7 = vsyncpa [#allocation4], 0
    // Predicated region
    $region2: #{tpu_custom_call.1} parent=1 // pred_check
      _
    $region3: #{tpu_custom_call.1} parent=1 // pred_check_branch
      %9 = sbr.rel (0) target = $region5
    $region4: #{tpu_custom_call.1} parent=1 // pred_region
      %s11 = ssub.s32 32, 32
      %12 = vsyncadd [#allocation3], %s11
      %s14 = sshll.u32 [#allocation2], 4
      %s15 = int_to_ptr.vmem [resolvable:$true] %s14
      %17 = dma.hbm_to_vmem [thread:$0]  %s0, 32, %s15, [#allocation3]
    $region5: #{tpu_custom_call.1} parent=1 // pred_fallthru
      _
    // Predicated region
    $region6: #{tpu_custom_call.1} parent=1 // pred_check
      _
    $region7: #{tpu_custom_call.1} parent=1 // pred_check_branch
      %19 = sbr.rel (0) target = $region9
    $region8: #{tpu_custom_call.1} parent=1 // pred_region
      %20 = dma.done [#allocation3], 32
    $region9: #{tpu_custom_call.1} parent=1 // pred_fallthru
      _
    %v21 = vld [vmem:[#allocation2] sm:$0x3]
    %v22 = vand.u32 %v21, 255
    %v23 = vcvt.s32.f32 %v22
    %v24 = vmul.f32 %v23, 0.003921569
    %25 = vst [vmem:[#allocation5] sm:$0x3] %v24
    %v26 = vshrl.u32 %v21, 8
    %v27 = vand.u32 %v26, 255
    %v28 = vcvt.s32.f32 %v27
    %v29 = vmul.f32 %v28, 0.003921569
    %s30 = scalar_lea.vmem [#allocation5], 2
    %31 = vst [vmem:[%s30] sm:$0x3] %v29
    %v32 = vshrl.u32 %v21, 16
    %v33 = vand.u32 %v32, 255
    %v34 = vcvt.s32.f32 %v33
    %v35 = vmul.f32 %v34, 0.003921569
    %s36 = scalar_lea.vmem [#allocation5], 4
    %37 = vst [vmem:[%s36] sm:$0x3] %v35
    %v38 = vshrl.u32 %v21, 24
    %v39 = vand.u32 %v38, 255
    %v40 = vcvt.s32.f32 %v39
    %v41 = vmul.f32 %v40, 0.003921569
    %s42 = scalar_lea.vmem [#allocation5], 6
    %43 = vst [vmem:[%s42] sm:$0x3] %v41
    // Predicated region
    $region10: #{tpu_custom_call.1} parent=1 // pred_check
      _
    $region11: #{tpu_custom_call.1} parent=1 // pred_check_branch
      %45 = sbr.rel (0) target = $region13
    $region12: #{tpu_custom_call.1} parent=1 // pred_region
      %s47 = ssub.s32 128, 128
      %48 = vsyncadd [#allocation4], %s47
      %s49 = sshll.u32 [#allocation5], 4
      %s50 = int_to_ptr.vmem [resolvable:$true] %s49
      %55 = dma.vmem_to_hbm [thread:$0]  %s50, 128, %s1, [#allocation4], 32, 32, 2
    $region13: #{tpu_custom_call.1} parent=1 // pred_fallthru
      _
    // Predicated region
    $region14: #{tpu_custom_call.1} parent=1 // pred_check
      _
    $region15: #{tpu_custom_call.1} parent=1 // pred_check_branch
      %57 = sbr.rel (0) target = $region17
    $region16: #{tpu_custom_call.1} parent=1 // pred_region
      %58 = dma.done [#allocation4], 128
    $region17: #{tpu_custom_call.1} parent=1 // pred_fallthru
      _
    %59 = vsyncpa [#allocation3], 1
    %60 = vsyncpa [#allocation4], 1

</llo_original>
